<compile_context>
chip_gen: v5e
topology: v5e:2x2
jax: 0.10.0
libtpu: 0.0.40
codegen_flags: <defaults>
</compile_context>

<pallas_src>
import math
import functools

import jax
import jax.numpy as jnp
from jax import lax
from jax.experimental import pallas as pl
from jax.experimental.pallas import tpu as pltpu


_SQRT_HALF = 1.0 / math.sqrt(2.0)


def _gelu_exact(x):
    # PyTorch nn.GELU() default = exact erf formulation.
    return 0.5 * x * (1.0 + lax.erf(x * _SQRT_HALF))


def _round_up(n, m):
    return ((n + m - 1) // m) * m


def _cdiv(a, b):
    return -(-a // b)


def _vmem_budget_and_cap():
    """Generation-aware (budget, vmem_limit_cap) in bytes."""
    try:
        phys = int(pltpu.get_tpu_info().vmem_capacity_bytes)
    except Exception:
        phys = 64 << 20  # conservative (v7x-sized) fallback
    if phys >= (128 << 20):          # v5e / v6e: 128 MiB VMEM
        return 100 << 20, 110 << 20
    return 44 << 20, 52 << 20        # v7x: 64 MiB per TC, leave headroom


def denoising_head_kernel(x_ref, w1_ref, b1_ref, gamma_ref, beta_ref,
                          w2_ref, b2_ref, o_ref, *, eps, matmul_dtype,
                          gelu_approx, ln_one_pass):
    # x_ref: (TM, D_in)   w1_ref: (D_in, H)       b1_ref: (1, H)
    # gamma/beta: (1, H)  w2_ref: (H, D_out_p)    b2_ref: (1, D_out_p)
    x = x_ref[...]

    # Linear 1 on the MXU (bf16 inputs, f32 accumulation when matmul_dtype=bf16).
    h = jnp.dot(x.astype(matmul_dtype), w1_ref[...],
                preferred_element_type=jnp.float32) + b1_ref[...]

    # GELU. Exact erf matches torch.nn.GELU default; tanh approx uses the EUP slot.
    if gelu_approx:
        g = jax.nn.gelu(h, approximate=True)
    else:
        g = _gelu_exact(h)

    # LayerNorm over the hidden dim, f32, eps matches torch default 1e-5.
    mean = jnp.mean(g, axis=-1, keepdims=True)
    if ln_one_pass:
        # One pass over g for both stats: var = E[g^2] - mean^2 (clamped >= 0).
        msq = jnp.mean(g * g, axis=-1, keepdims=True)
        var = jnp.maximum(msq - mean * mean, 0.0)
        centered = g - mean
    else:
        centered = g - mean
        var = jnp.mean(centered * centered, axis=-1, keepdims=True)
    ln = centered * lax.rsqrt(var + eps) * gamma_ref[...] + beta_ref[...]

    # Linear 2 on the MXU.
    out = jnp.dot(ln.astype(matmul_dtype), w2_ref[...],
                  preferred_element_type=jnp.float32) + b2_ref[...]
    o_ref[...] = out.astype(o_ref.dtype)


def prepare_params(params, *, matmul_dtype=jnp.bfloat16):
    """One-time parameter prep (cast/pad/reshape). Cache and reuse across calls."""
    w1, b1, gamma, beta, w2, b2 = params
    D_in, H = w1.shape
    D_out = w2.shape[1]

    # Lane-dense output padding only when the real width is already >= one vreg
    # lane row and the pad overhead is small; otherwise keep the true width
    # (a full last dim is exempt from the 128-divisibility rule).
    D_out_p = _round_up(D_out, 128)
    if D_out_p != D_out and (D_out < 128 or 4 * (D_out_p - D_out) > D_out):
        D_out_p = D_out

    if D_out_p != D_out:
        w2_p = jnp.pad(w2, ((0, 0), (0, D_out_p - D_out)))
        b2_p = jnp.pad(b2, (0, D_out_p - D_out))
    else:
        w2_p, b2_p = w2, b2

    return dict(
        w1=w1.astype(matmul_dtype),
        b1=b1.reshape(1, H).astype(jnp.float32),
        gamma=gamma.reshape(1, H).astype(jnp.float32),
        beta=beta.reshape(1, H).astype(jnp.float32),
        w2=w2_p.astype(matmul_dtype),
        b2=b2_p.reshape(1, D_out_p).astype(jnp.float32),
        D_in=D_in, H=H, D_out=D_out, D_out_p=D_out_p,
        matmul_dtype=matmul_dtype,
    )


def denoising_head(x, prepped, *, tile_rows=None, eps=1e-5, out_dtype=None,
                   gelu_approx=False, ln_one_pass=True, min_grid_steps=2):
    """x: [B, T, D_in] -> [B, T, D_out]. `prepped` comes from prepare_params()."""
    B, T, D_in = x.shape
    assert D_in == prepped["D_in"], (D_in, prepped["D_in"])
    H = prepped["H"]
    D_out = prepped["D_out"]
    D_out_p = prepped["D_out_p"]
    matmul_dtype = prepped["matmul_dtype"]
    out_dtype = x.dtype if out_dtype is None else out_dtype

    rows = B * T
    x_bytes = jnp.dtype(x.dtype).itemsize
    o_bytes = jnp.dtype(out_dtype).itemsize
    w_bytes = jnp.dtype(matmul_dtype).itemsize

    budget, cap = _vmem_budget_and_cap()

    def footprint(tr):
        inp = 2 * tr * D_in * x_bytes                   # x tile, double-buffered
        outp = 2 * tr * D_out_p * o_bytes               # out tile, double-buffered
        weights = (D_in * H + H * D_out_p) * w_bytes    # W1/W2, single-buffered
        vecs = (3 * H + D_out_p) * 4                    # b1, gamma, beta, b2
        interm = 6 * tr * H * 4 + tr * D_out_p * 4      # live f32 temporaries
        return inp + outp + weights + vecs + interm

    # Largest row tile (multiple of 8) fitting the generation-aware VMEM budget.
    if tile_rows is None:
        tile_rows = 512
    tile_rows = max(8, _round_up(min(tile_rows, _round_up(rows, 8)), 8))
    while tile_rows > 8 and footprint(tile_rows) > budget:
        tile_rows = max(8, _round_up(tile_rows // 2, 8))

    # >=2 grid steps (when rows allow) so the "parallel" axis spans both v7x TCs.
    n_steps = _cdiv(rows, tile_rows)
    if n_steps < min_grid_steps and rows > 8:
        n_steps = min(min_grid_steps, _cdiv(rows, 8))

    # Keep the step count but shrink the tile to the minimum multiple of 8 that
    # still covers `rows` -> bounded padding waste (e.g. 513 rows -> 2x264, not 1024).
    tile_rows = max(8, _round_up(_cdiv(rows, n_steps), 8))
    n_steps = _cdiv(rows, tile_rows)
    rows_p = n_steps * tile_rows

    x2d = x.reshape(rows, D_in)
    if rows_p != rows:
        x2d = jnp.pad(x2d, ((0, rows_p - rows), (0, 0)))

    grid = (n_steps,)
    resident = pl.Buffered(1)  # constant index_map -> single-buffer residents

    vmem_limit = int(min(max(int(1.25 * footprint(tile_rows)), 16 << 20), cap))

    out2d = pl.pallas_call(
        functools.partial(denoising_head_kernel, eps=eps,
                          matmul_dtype=matmul_dtype,
                          gelu_approx=gelu_approx,
                          ln_one_pass=ln_one_pass),
        out_shape=jax.ShapeDtypeStruct((rows_p, D_out_p), out_dtype),
        grid_spec=pltpu.PrefetchScalarGridSpec(
            num_scalar_prefetch=0,
            grid=grid,
            in_specs=[
                pl.BlockSpec((tile_rows, D_in), lambda i: (i, 0)),    # x rows tiled
                pl.BlockSpec((D_in, H), lambda i: (0, 0),
                             pipeline_mode=resident),                 # W1 (resident)
                pl.BlockSpec((1, H), lambda i: (0, 0),
                             pipeline_mode=resident),                 # b1
                pl.BlockSpec((1, H), lambda i: (0, 0),
                             pipeline_mode=resident),                 # LN gamma
                pl.BlockSpec((1, H), lambda i: (0, 0),
                             pipeline_mode=resident),                 # LN beta
                pl.BlockSpec((H, D_out_p), lambda i: (0, 0),
                             pipeline_mode=resident),                 # W2 (resident)
                pl.BlockSpec((1, D_out_p), lambda i: (0, 0),
                             pipeline_mode=resident),                 # b2
            ],
            out_specs=pl.BlockSpec((tile_rows, D_out_p), lambda i: (i, 0)),
        ),
        compiler_params=pltpu.CompilerParams(
            dimension_semantics=("parallel",),
            vmem_limit_bytes=vmem_limit),
    )(x2d, prepped["w1"], prepped["b1"], prepped["gamma"], prepped["beta"],
      prepped["w2"], prepped["b2"])

    if rows_p != rows or D_out_p != D_out:
        out2d = out2d[:rows, :D_out]
    return out2d.reshape(B, T, D_out)


def init_params(key, input_dim, hidden_dim, output_dim):
    """Deterministic init mirroring nn.Linear / nn.LayerNorm parameter shapes.

    Weights are stored transposed ([in, out]) relative to PyTorch's [out, in]
    so the kernel can do row @ W directly.
    """
    k1, k2, k3, k4 = jax.random.split(key, 4)
    lim1 = 1.0 / math.sqrt(input_dim)
    lim2 = 1.0 / math.sqrt(hidden_dim)
    w1 = jax.random.uniform(k1, (input_dim, hidden_dim), jnp.float32, -lim1, lim1)
    b1 = jax.random.uniform(k2, (hidden_dim,), jnp.float32, -lim1, lim1)
    gamma = jnp.ones((hidden_dim,), jnp.float32)   # LayerNorm weight
    beta = jnp.zeros((hidden_dim,), jnp.float32)   # LayerNorm bias
    w2 = jax.random.uniform(k3, (hidden_dim, output_dim), jnp.float32, -lim2, lim2)
    b2 = jax.random.uniform(k4, (output_dim,), jnp.float32, -lim2, lim2)
    return (w1, b1, gamma, beta, w2, b2)


def reference(x, params, eps=1e-5):
    """Pure-JAX f32 reference for correctness check."""
    w1, b1, gamma, beta, w2, b2 = params
    h = x @ w1 + b1
    g = _gelu_exact(h)
    mean = jnp.mean(g, axis=-1, keepdims=True)
    var = jnp.mean((g - mean) ** 2, axis=-1, keepdims=True)
    ln = (g - mean) * lax.rsqrt(var + eps) * gamma + beta
    return ln @ w2 + b2


if __name__ == "__main__":
    B, T = 2, 8
    input_dim, hidden_dim, output_dim = 32, 32, 16

    key = jax.random.PRNGKey(0)
    kx, kp = jax.random.split(key)
    x = jax.random.normal(kx, (B, T, input_dim), dtype=jnp.float32)
    params = init_params(kp, input_dim, hidden_dim, output_dim)

    ref = reference(x, params)

    # f32 MXU path, two-pass LN: near-bit-exact vs. the f32 reference.
    prepped_f32 = prepare_params(params, matmul_dtype=jnp.float32)
    out_f32 = jax.block_until_ready(
        denoising_head(x, prepped_f32, ln_one_pass=False))
    assert out_f32.shape == (B, T, output_dim), out_f32.shape
    assert jnp.allclose(out_f32, ref, atol=1e-4, rtol=1e-4), float(
        jnp.max(jnp.abs(out_f32 - ref)))

    # bf16-MXU fast path with one-pass LN stats (default); weights prepared once.
    prepped_bf16 = prepare_params(params)
    out_bf16 = jax.block_until_ready(denoising_head(x, prepped_bf16))
    assert out_bf16.shape == (B, T, output_dim), out_bf16.shape
    assert jnp.allclose(out_bf16, ref, atol=5e-2, rtol=5e-2), float(
        jnp.max(jnp.abs(out_bf16 - ref)))

    # bf16 activation boundary: x and output in bf16 (halves x/out HBM traffic).
    out_b = jax.block_until_ready(
        denoising_head(x.astype(jnp.bfloat16), prepped_bf16,
                       out_dtype=jnp.bfloat16))
    assert out_b.dtype == jnp.bfloat16
    assert jnp.allclose(out_b.astype(jnp.float32), ref, atol=1.5e-1, rtol=1.5e-1), \
        float(jnp.max(jnp.abs(out_b.astype(jnp.float32) - ref)))

    print("KERNEL_OK")
</pallas_src>

<mosaic_0001>
module attributes {stable_mosaic.version = 11 : i64} {
  func.func @denoising_head_kernel(%arg0: i32, %arg1: memref<8x32xf32, #tpu.memory_space<vmem>>, %arg2: memref<32x32xf32, #tpu.memory_space<vmem>>, %arg3: memref<1x32xf32, #tpu.memory_space<vmem>>, %arg4: memref<1x32xf32, #tpu.memory_space<vmem>>, %arg5: memref<1x32xf32, #tpu.memory_space<vmem>>, %arg6: memref<32x16xf32, #tpu.memory_space<vmem>>, %arg7: memref<1x16xf32, #tpu.memory_space<vmem>>, %arg8: memref<8x16xf32, #tpu.memory_space<vmem>>) attributes {dimension_semantics = [#tpu.dimension_semantics<parallel>], iteration_bounds = array<i64: 2>, scalar_prefetch = 0 : i64, scratch_operands = 0 : i64, tpu.core_type = #tpu.core_type<tc>, window_params = [{transform_indices = @transform_0, window_bounds = array<i64: 8, 32>}, {pipeline_mode = #tpu.pipeline_mode<synchronous>, transform_indices = @transform_1, window_bounds = array<i64: 32, 32>}, {pipeline_mode = #tpu.pipeline_mode<synchronous>, transform_indices = @transform_2, window_bounds = array<i64: 1, 32>}, {pipeline_mode = #tpu.pipeline_mode<synchronous>, transform_indices = @transform_3, window_bounds = array<i64: 1, 32>}, {pipeline_mode = #tpu.pipeline_mode<synchronous>, transform_indices = @transform_4, window_bounds = array<i64: 1, 32>}, {pipeline_mode = #tpu.pipeline_mode<synchronous>, transform_indices = @transform_5, window_bounds = array<i64: 32, 16>}, {pipeline_mode = #tpu.pipeline_mode<synchronous>, transform_indices = @transform_6, window_bounds = array<i64: 1, 16>}, {transform_indices = @transform_7, window_bounds = array<i64: 8, 16>}]} {
    %c0 = arith.constant 0 : index
    %c0_0 = arith.constant 0 : index
    %0 = vector.load %arg1[%c0, %c0_0] : memref<8x32xf32, #tpu.memory_space<vmem>>, vector<8x32xf32>
    %c0_1 = arith.constant 0 : index
    %c0_2 = arith.constant 0 : index
    %1 = vector.load %arg2[%c0_1, %c0_2] : memref<32x32xf32, #tpu.memory_space<vmem>>, vector<32x32xf32>
    %cst = arith.constant dense<0.000000e+00> : vector<8x32xf32>
    %2 = tpu.matmul %0, %1, %cst {dimension_numbers = #tpu.dot_dimension_numbers<[1], [0], [0], [1], [0, 0, 1, 1], [], []>} : vector<8x32xf32>, vector<32x32xf32>, vector<8x32xf32> -> vector<8x32xf32>
    %c0_3 = arith.constant 0 : index
    %c0_4 = arith.constant 0 : index
    %3 = vector.load %arg3[%c0_3, %c0_4] : memref<1x32xf32, #tpu.memory_space<vmem>>, vector<1x32xf32>
    %4 = vector.broadcast %3 : vector<1x32xf32> to vector<8x32xf32>
    %5 = arith.addf %2, %4 : vector<8x32xf32>
    %cst_5 = arith.constant 5.000000e-01 : f32
    %6 = vector.broadcast %cst_5 : f32 to vector<8x32xf32>
    %7 = arith.mulf %6, %5 : vector<8x32xf32>
    %cst_6 = arith.constant 0.707106769 : f32
    %8 = vector.broadcast %cst_6 : f32 to vector<8x32xf32>
    %9 = arith.mulf %5, %8 : vector<8x32xf32>
    %10 = math.erf %9 : vector<8x32xf32>
    %cst_7 = arith.constant 1.000000e+00 : f32
    %11 = vector.broadcast %cst_7 : f32 to vector<8x32xf32>
    %12 = arith.addf %11, %10 : vector<8x32xf32>
    %13 = arith.mulf %7, %12 : vector<8x32xf32>
    %cst_8 = arith.constant dense<0.000000e+00> : vector<8xf32>
    %14 = vector.multi_reduction <add>, %13, %cst_8 [1] : vector<8x32xf32> to vector<8xf32>
    %15 = vector.shape_cast %14 : vector<8xf32> to vector<8x1xf32>
    %cst_9 = arith.constant 3.200000e+01 : f32
    %16 = vector.broadcast %cst_9 : f32 to vector<8x1xf32>
    %17 = arith.divf %15, %16 : vector<8x1xf32>
    %18 = vector.broadcast %17 : vector<8x1xf32> to vector<8x32xf32>
    %19 = arith.subf %13, %18 : vector<8x32xf32>
    %20 = arith.mulf %19, %19 : vector<8x32xf32>
    %cst_10 = arith.constant dense<0.000000e+00> : vector<8xf32>
    %21 = vector.multi_reduction <add>, %20, %cst_10 [1] : vector<8x32xf32> to vector<8xf32>
    %22 = vector.shape_cast %21 : vector<8xf32> to vector<8x1xf32>
    %cst_11 = arith.constant 3.200000e+01 : f32
    %23 = vector.broadcast %cst_11 : f32 to vector<8x1xf32>
    %24 = arith.divf %22, %23 : vector<8x1xf32>
    %cst_12 = arith.constant 9.99999974E-6 : f32
    %25 = vector.broadcast %cst_12 : f32 to vector<8x1xf32>
    %26 = arith.addf %24, %25 : vector<8x1xf32>
    %27 = math.rsqrt %26 : vector<8x1xf32>
    %28 = vector.broadcast %27 : vector<8x1xf32> to vector<8x32xf32>
    %29 = arith.mulf %19, %28 : vector<8x32xf32>
    %c0_13 = arith.constant 0 : index
    %c0_14 = arith.constant 0 : index
    %30 = vector.load %arg4[%c0_13, %c0_14] : memref<1x32xf32, #tpu.memory_space<vmem>>, vector<1x32xf32>
    %31 = vector.broadcast %30 : vector<1x32xf32> to vector<8x32xf32>
    %32 = arith.mulf %29, %31 : vector<8x32xf32>
    %c0_15 = arith.constant 0 : index
    %c0_16 = arith.constant 0 : index
    %33 = vector.load %arg5[%c0_15, %c0_16] : memref<1x32xf32, #tpu.memory_space<vmem>>, vector<1x32xf32>
    %34 = vector.broadcast %33 : vector<1x32xf32> to vector<8x32xf32>
    %35 = arith.addf %32, %34 : vector<8x32xf32>
    %c0_17 = arith.constant 0 : index
    %c0_18 = arith.constant 0 : index
    %36 = vector.load %arg6[%c0_17, %c0_18] : memref<32x16xf32, #tpu.memory_space<vmem>>, vector<32x16xf32>
    %cst_19 = arith.constant dense<0.000000e+00> : vector<8x16xf32>
    %37 = tpu.matmul %35, %36, %cst_19 {dimension_numbers = #tpu.dot_dimension_numbers<[1], [0], [0], [1], [0, 0, 1, 1], [], []>} : vector<8x32xf32>, vector<32x16xf32>, vector<8x16xf32> -> vector<8x16xf32>
    %c0_20 = arith.constant 0 : index
    %c0_21 = arith.constant 0 : index
    %38 = vector.load %arg7[%c0_20, %c0_21] : memref<1x16xf32, #tpu.memory_space<vmem>>, vector<1x16xf32>
    %39 = vector.broadcast %38 : vector<1x16xf32> to vector<8x16xf32>
    %40 = arith.addf %37, %39 : vector<8x16xf32>
    %c0_22 = arith.constant 0 : index
    %c0_23 = arith.constant 0 : index
    %41 = vector.load %arg8[%c0_22, %c0_23] : memref<8x16xf32, #tpu.memory_space<vmem>>, vector<8x16xf32>
    tpu.vector_store %arg8[%c0_22, %c0_23], %40 {strides = array<i32>} : memref<8x16xf32, #tpu.memory_space<vmem>>, vector<8x16xf32>,
    return
  }
  func.func @transform_0(%arg0: i32) -> (i32, i32) {
    %c0_i32 = arith.constant 0 : i32
    %c0_i32_0 = arith.constant 0 : i32
    return %arg0, %c0_i32 : i32, i32
  }
  func.func @transform_1(%arg0: i32) -> (i32, i32) {
    %c0_i32 = arith.constant 0 : i32
    %c0_i32_0 = arith.constant 0 : i32
    %c0_i32_1 = arith.constant 0 : i32
    return %c0_i32, %c0_i32_0 : i32, i32
  }
  func.func @transform_2(%arg0: i32) -> (i32, i32) {
    %c0_i32 = arith.constant 0 : i32
    %c0_i32_0 = arith.constant 0 : i32
    %c0_i32_1 = arith.constant 0 : i32
    return %c0_i32, %c0_i32_0 : i32, i32
  }
  func.func @transform_3(%arg0: i32) -> (i32, i32) {
    %c0_i32 = arith.constant 0 : i32
    %c0_i32_0 = arith.constant 0 : i32
    %c0_i32_1 = arith.constant 0 : i32
    return %c0_i32, %c0_i32_0 : i32, i32
  }
  func.func @transform_4(%arg0: i32) -> (i32, i32) {
    %c0_i32 = arith.constant 0 : i32
    %c0_i32_0 = arith.constant 0 : i32
    %c0_i32_1 = arith.constant 0 : i32
    return %c0_i32, %c0_i32_0 : i32, i32
  }
  func.func @transform_5(%arg0: i32) -> (i32, i32) {
    %c0_i32 = arith.constant 0 : i32
    %c0_i32_0 = arith.constant 0 : i32
    %c0_i32_1 = arith.constant 0 : i32
    return %c0_i32, %c0_i32_0 : i32, i32
  }
  func.func @transform_6(%arg0: i32) -> (i32, i32) {
    %c0_i32 = arith.constant 0 : i32
    %c0_i32_0 = arith.constant 0 : i32
    %c0_i32_1 = arith.constant 0 : i32
    return %c0_i32, %c0_i32_0 : i32, i32
  }
  func.func @transform_7(%arg0: i32) -> (i32, i32) {
    %c0_i32 = arith.constant 0 : i32
    %c0_i32_0 = arith.constant 0 : i32
    return %arg0, %c0_i32 : i32, i32
  }
}

</mosaic_0001>

<llo_original>
// kernel: tpu_custom_call.1
$region0: #{tpu_custom_call.1}
  #allocation0 [shape = 'u32[]', space=smem, size = 0x4, offset = 0x4, fixed_abs, tag = 'smem constant byte address 0x4 - core index']
  #allocation1 [shape = 'u32[72,128]{1,0:T(1,128)}', space=vmem, size = 0x9000, scoped, tag = 'internal scratch']
  %s0 = inlined_call_operand.vmem [shape: f32[16,32], index: 0, kind: input, shape index: {}]
  %s1 = inlined_call_operand.vmem [shape: f32[32,32], index: 1, kind: input, shape index: {}]
  %s2 = inlined_call_operand.vmem [shape: f32[1,32], index: 2, kind: input, shape index: {}]
  %s3 = inlined_call_operand.vmem [shape: f32[1,32], index: 3, kind: input, shape index: {}]
  %s4 = inlined_call_operand.vmem [shape: f32[1,32], index: 4, kind: input, shape index: {}]
  %s5 = inlined_call_operand.vmem [shape: f32[32,16], index: 5, kind: input, shape index: {}]
  %s6 = inlined_call_operand.vmem [shape: f32[1,16], index: 6, kind: input, shape index: {}]
  %s7 = inlined_call_operand.hbm [shape: f32[16,16], index: 7, kind: output, shape index: {}]
  %s8 = sld [smem:[#allocation0]]
  $region61: #{tpu_custom_call.1} parent=0
    _
  %s10 = ssub.s32 1, %s8
  %s11 = scalar_select 0, %s10, %s8
  $region1: #{tpu_custom_call.1} parent=0
    #allocation2 [shape = 'u8[8192]{0}', space=vmem, size = 0x2000, scoped, tag = 'output window, operand 0']
    #allocation3 [shape = 's32[2]{0}', space=sflag, size = 0x8, scoped, tag = 'scoped memory for tpu_custom_call.1']
    %12 = vsyncpa [#allocation3], 0
    %s13 = scalar_lea.sflag [#allocation3], 1
    %14 = vsyncpa %s13, 0
    loop: start=0, step=1, limit=4
    $region2: #{tpu_custom_call.1} parent=1 // loop_pre_header
      _
    $region3: #{tpu_custom_call.1} parent=1 // loop_header
      %s16 = sphi 0, %s20
      %p17 = scmp.ge.s32.totalorder %s16, 4
      %s26 = sphi 0, %s28
      %s29 = sphi 0, %s26
      %s30 = sphi 0, %s29
      %s46 = sphi 0, %s30
      %s50 = sphi 0, %s50
      %s52 = sphi 0, %s50
      %s53 = sphi 0, %s52
      %s67 = sphi 0, %s53
      %s71 = sphi 0, %s71
      %s73 = sphi 0, %s71
      %s74 = sphi 0, %s73
      %s88 = sphi 0, %s74
      %s92 = sphi 0, %s92
      %s94 = sphi 0, %s92
      %s95 = sphi 0, %s94
      %s109 = sphi 0, %s95
      %s113 = sphi 0, %s113
      %s115 = sphi 0, %s113
      %s116 = sphi 0, %s115
      %s130 = sphi 0, %s116
      %s134 = sphi 0, %s134
      %s136 = sphi 0, %s134
      %s137 = sphi 0, %s136
      %s151 = sphi 0, %s137
      %s155 = sphi 0, %s155
      %s157 = sphi 0, %s155
      %s158 = sphi 0, %s157
      %s172 = sphi 0, %s158
      %s178 = sphi 0, %s180
      %s181 = sphi 0, %s178
      %s182 = sphi 0, %s181
      %s198 = sphi 0, %s182
    $region4: #{tpu_custom_call.1} parent=1 // loop_header_branch
      %19 = sbr.rel (%p17) target = $region8
    $region5: #{tpu_custom_call.1} parent=1 // loop_body
      %s21 = ssub.s32 %s16, 1
      %s22 = ssub.s32 %s16, 2
      %s23 = sadd.s32 %s16, 1
      %s24 = ssub.s32 %s16, %s23
      %p25 = scmp.eq.s32.totalorder %s24, 0
      %s27 = sadd.s32 %s26, 1
      %s28 = scalar_select %p25, %s26, %s27
      %p31 = pneg %p25
      %p32 = scmp.eq.s32.totalorder %s16, 1
      %p33 = por %p31, %p32
      %p34 = scmp.ne.s32.totalorder %s26, %s29
      %p35 = scmp.eq.s32.totalorder %s16, 0
      %p36 = por %p34, %p35
      %p37 = scmp.ne.s32.totalorder %s26, %s29
      %p38 = scmp.eq.s32.totalorder %s21, 1
      %p39 = por %p37, %p38
      %p40 = scmp.ne.s32.totalorder %s29, %s30
      %p41 = scmp.eq.s32.totalorder %s21, 0
      %p42 = por %p40, %p41
      %p43 = scmp.ne.s32.totalorder %s29, %s30
      %p44 = scmp.eq.s32.totalorder %s22, 1
      %p45 = por %p43, %p44
      %p47 = scmp.ne.s32.totalorder %s30, %s46
      %p48 = scmp.eq.s32.totalorder %s22, 0
      %p49 = por %p47, %p48
      %s51 = sadd.s32 %s50, 1
      %p54 = scmp.eq.s32.totalorder %s16, 1
      %p55 = scmp.ne.s32.totalorder %s50, %s52
      %p56 = scmp.eq.s32.totalorder %s16, 0
      %p57 = por %p55, %p56
      %p58 = scmp.ne.s32.totalorder %s50, %s52
      %p59 = scmp.eq.s32.totalorder %s21, 1
      %p60 = por %p58, %p59
      %p61 = scmp.ne.s32.totalorder %s52, %s53
      %p62 = scmp.eq.s32.totalorder %s21, 0
      %p63 = por %p61, %p62
      %p64 = scmp.ne.s32.totalorder %s52, %s53
      %p65 = scmp.eq.s32.totalorder %s22, 1
      %p66 = por %p64, %p65
      %p68 = scmp.ne.s32.totalorder %s53, %s67
      %p69 = scmp.eq.s32.totalorder %s22, 0
      %p70 = por %p68, %p69
      %s72 = sadd.s32 %s71, 1
      %p75 = scmp.eq.s32.totalorder %s16, 1
      %p76 = scmp.ne.s32.totalorder %s71, %s73
      %p77 = scmp.eq.s32.totalorder %s16, 0
      %p78 = por %p76, %p77
      %p79 = scmp.ne.s32.totalorder %s71, %s73
      %p80 = scmp.eq.s32.totalorder %s21, 1
      %p81 = por %p79, %p80
      %p82 = scmp.ne.s32.totalorder %s73, %s74
      %p83 = scmp.eq.s32.totalorder %s21, 0
      %p84 = por %p82, %p83
      %p85 = scmp.ne.s32.totalorder %s73, %s74
      %p86 = scmp.eq.s32.totalorder %s22, 1
      %p87 = por %p85, %p86
      %p89 = scmp.ne.s32.totalorder %s74, %s88
      %p90 = scmp.eq.s32.totalorder %s22, 0
      %p91 = por %p89, %p90
      %s93 = sadd.s32 %s92, 1
      %p96 = scmp.eq.s32.totalorder %s16, 1
      %p97 = scmp.ne.s32.totalorder %s92, %s94
      %p98 = scmp.eq.s32.totalorder %s16, 0
      %p99 = por %p97, %p98
      %p100 = scmp.ne.s32.totalorder %s92, %s94
      %p101 = scmp.eq.s32.totalorder %s21, 1
      %p102 = por %p100, %p101
      %p103 = scmp.ne.s32.totalorder %s94, %s95
      %p104 = scmp.eq.s32.totalorder %s21, 0
      %p105 = por %p103, %p104
      %p106 = scmp.ne.s32.totalorder %s94, %s95
      %p107 = scmp.eq.s32.totalorder %s22, 1
      %p108 = por %p106, %p107
      %p110 = scmp.ne.s32.totalorder %s95, %s109
      %p111 = scmp.eq.s32.totalorder %s22, 0
      %p112 = por %p110, %p111
      %s114 = sadd.s32 %s113, 1
      %p117 = scmp.eq.s32.totalorder %s16, 1
      %p118 = scmp.ne.s32.totalorder %s113, %s115
      %p119 = scmp.eq.s32.totalorder %s16, 0
      %p120 = por %p118, %p119
      %p121 = scmp.ne.s32.totalorder %s113, %s115
      %p122 = scmp.eq.s32.totalorder %s21, 1
      %p123 = por %p121, %p122
      %p124 = scmp.ne.s32.totalorder %s115, %s116
      %p125 = scmp.eq.s32.totalorder %s21, 0
      %p126 = por %p124, %p125
      %p127 = scmp.ne.s32.totalorder %s115, %s116
      %p128 = scmp.eq.s32.totalorder %s22, 1
      %p129 = por %p127, %p128
      %p131 = scmp.ne.s32.totalorder %s116, %s130
      %p132 = scmp.eq.s32.totalorder %s22, 0
      %p133 = por %p131, %p132
      %s135 = sadd.s32 %s134, 1
      %p138 = scmp.eq.s32.totalorder %s16, 1
      %p139 = scmp.ne.s32.totalorder %s134, %s136
      %p140 = scmp.eq.s32.totalorder %s16, 0
      %p141 = por %p139, %p140
      %p142 = scmp.ne.s32.totalorder %s134, %s136
      %p143 = scmp.eq.s32.totalorder %s21, 1
      %p144 = por %p142, %p143
      %p145 = scmp.ne.s32.totalorder %s136, %s137
      %p146 = scmp.eq.s32.totalorder %s21, 0
      %p147 = por %p145, %p146
      %p148 = scmp.ne.s32.totalorder %s136, %s137
      %p149 = scmp.eq.s32.totalorder %s22, 1
      %p150 = por %p148, %p149
      %p152 = scmp.ne.s32.totalorder %s137, %s151
      %p153 = scmp.eq.s32.totalorder %s22, 0
      %p154 = por %p152, %p153
      %s156 = sadd.s32 %s155, 1
      %p159 = scmp.eq.s32.totalorder %s16, 1
      %p160 = scmp.ne.s32.totalorder %s155, %s157
      %p161 = scmp.eq.s32.totalorder %s16, 0
      %p162 = por %p160, %p161
      %p163 = scmp.ne.s32.totalorder %s155, %s157
      %p164 = scmp.eq.s32.totalorder %s21, 1
      %p165 = por %p163, %p164
      %p166 = scmp.ne.s32.totalorder %s157, %s158
      %p167 = scmp.eq.s32.totalorder %s21, 0
      %p168 = por %p166, %p167
      %p169 = scmp.ne.s32.totalorder %s157, %s158
      %p170 = scmp.eq.s32.totalorder %s22, 1
      %p171 = por %p169, %p170
      %p173 = scmp.ne.s32.totalorder %s158, %s172
      %p174 = scmp.eq.s32.totalorder %s22, 0
      %p175 = por %p173, %p174
      %s176 = ssub.s32 %s16, %s23
      %p177 = scmp.eq.s32.totalorder %s176, 0
      %s179 = sadd.s32 %s178, 1
      %s180 = scalar_select %p177, %s178, %s179
      %p183 = pneg %p177
      %p184 = scmp.eq.s32.totalorder %s16, 1
      %p185 = por %p183, %p184
      %p186 = scmp.ne.s32.totalorder %s178, %s181
      %p187 = scmp.eq.s32.totalorder %s16, 0
      %p188 = por %p186, %p187
      %p189 = scmp.ne.s32.totalorder %s178, %s181
      %p190 = scmp.eq.s32.totalorder %s21, 1
      %p191 = por %p189, %p190
      %p192 = scmp.ne.s32.totalorder %s181, %s182
      %p193 = scmp.eq.s32.totalorder %s21, 0
      %p194 = por %p192, %p193
      %p195 = scmp.ne.s32.totalorder %s181, %s182
      %p196 = scmp.eq.s32.totalorder %s22, 1
      %p197 = por %p195, %p196
      %p199 = scmp.ne.s32.totalorder %s182, %s198
      %p200 = scmp.eq.s32.totalorder %s22, 0
      %p201 = por %p199, %p200
      %p202 = scmp.le.s32.totalorder 1, %s16
      %p203 = scmp.lt.s32.totalorder %s16, 3
      %p204 = pnand %p202, %p203
      %p205 = pneg %p204
      // Predicated region
      $region9: #{tpu_custom_call.1} parent=5 // pred_check
        _
      $region10: #{tpu_custom_call.1} parent=5 // pred_check_branch
        %207 = sbr.rel (%p204) target = $region12
      $region11: #{tpu_custom_call.1} parent=5 // pred_region
        %s208 = ssub.s32 %s16, 1
        // Predicated region
        $region13: #{tpu_custom_call.1} parent=11 // pred_check
          %p209 = pneg %p63
        $region14: #{tpu_custom_call.1} parent=11 // pred_check_branch
          %211 = sbr.rel (%p209) target = $region16
        $region15: #{tpu_custom_call.1} parent=11 // pred_region
          _
        $region16: #{tpu_custom_call.1} parent=11 // pred_fallthru
          _
        // Predicated region
        $region17: #{tpu_custom_call.1} parent=11 // pred_check
          %p212 = pneg %p84
        $region18: #{tpu_custom_call.1} parent=11 // pred_check_branch
          %214 = sbr.rel (%p212) target = $region20
        $region19: #{tpu_custom_call.1} parent=11 // pred_region
          _
        $region20: #{tpu_custom_call.1} parent=11 // pred_fallthru
          _
        // Predicated region
        $region21: #{tpu_custom_call.1} parent=11 // pred_check
          %p215 = pneg %p105
        $region22: #{tpu_custom_call.1} parent=11 // pred_check_branch
          %217 = sbr.rel (%p215) target = $region24
        $region23: #{tpu_custom_call.1} parent=11 // pred_region
          _
        $region24: #{tpu_custom_call.1} parent=11 // pred_fallthru
          _
        // Predicated region
        $region25: #{tpu_custom_call.1} parent=11 // pred_check
          %p218 = pneg %p126
        $region26: #{tpu_custom_call.1} parent=11 // pred_check_branch
          %220 = sbr.rel (%p218) target = $region28
        $region27: #{tpu_custom_call.1} parent=11 // pred_region
          _
        $region28: #{tpu_custom_call.1} parent=11 // pred_fallthru
          _
        // Predicated region
        $region29: #{tpu_custom_call.1} parent=11 // pred_check
          %p221 = pneg %p147
        $region30: #{tpu_custom_call.1} parent=11 // pred_check_branch
          %223 = sbr.rel (%p221) target = $region32
        $region31: #{tpu_custom_call.1} parent=11 // pred_region
          _
        $region32: #{tpu_custom_call.1} parent=11 // pred_fallthru
          _
        // Predicated region
        $region33: #{tpu_custom_call.1} parent=11 // pred_check
          %p224 = pneg %p168
        $region34: #{tpu_custom_call.1} parent=11 // pred_check_branch
          %226 = sbr.rel (%p224) target = $region36
        $region35: #{tpu_custom_call.1} parent=11 // pred_region
          _
        $region36: #{tpu_custom_call.1} parent=11 // pred_fallthru
          _
      $region12: #{tpu_custom_call.1} parent=5 // pred_fallthru
        _
      %p227 = scmp.lt.s32.totalorder %s16, 2
      // Predicated region
      $region37: #{tpu_custom_call.1} parent=5 // pred_check
        %p228 = pneg %p227
      $region38: #{tpu_custom_call.1} parent=5 // pred_check_branch
        %230 = sbr.rel (%p228) target = $region40
      $region39: #{tpu_custom_call.1} parent=5 // pred_region
        // Predicated region
        $region41: #{tpu_custom_call.1} parent=39 // pred_check
          %p231 = pneg %p36
        $region42: #{tpu_custom_call.1} parent=39 // pred_check_branch
          %233 = sbr.rel (%p231) target = $region44
        $region43: #{tpu_custom_call.1} parent=39 // pred_region
          %p234 = scmp.lt.s32.totalorder %s16, 1
          %s235 = scalar_select %p234, %s16, 1
          %s236 = smul.addr %s235, 8
          %s237 = scalar_lea.vmem %s0, %s236
        $region44: #{tpu_custom_call.1} parent=39 // pred_fallthru
          _
      $region40: #{tpu_custom_call.1} parent=5 // pred_fallthru
        _
      %p238 = scmp.le.s32.totalorder 1, %s16
      %p239 = scmp.lt.s32.totalorder %s16, 3
      %p240 = pnand %p238, %p239
      %p241 = pneg %p240
      // Predicated region
      $region45: #{tpu_custom_call.1} parent=5 // pred_check
        _
      $region46: #{tpu_custom_call.1} parent=5 // pred_check_branch
        %243 = sbr.rel (%p240) target = $region48
      $region47: #{tpu_custom_call.1} parent=5 // pred_region
        %s244 = ssub.s32 %s16, 1
        %p245 = scmp.lt.s32.totalorder %s21, 1
        %s246 = scalar_select %p245, %s21, 1
        %s247 = smul.addr %s246, 8
        %s248 = scalar_lea.vmem %s0, %s247
        %p249 = pneg %p42
        %p250 = pneg %p39
        %p251 = pneg %p63
        %p252 = pneg %p60
        %p253 = pneg %p84
        %p254 = pneg %p81
        %p255 = pneg %p105
        %p256 = pneg %p102
        %p257 = pneg %p126
        %p258 = pneg %p123
        %p259 = pneg %p147
        %p260 = pneg %p144
        %p261 = pneg %p168
        %p262 = pneg %p165
        %p263 = pneg %p194
        %p264 = pneg %p191
        %s265 = sand.u32 %s181, 1
        %s266 = scalar_lea.sflag [#allocation3], %s265
        %s267 = sand.u32 %s181, 1
        %s268 = smul.addr %s267, 8
        %s269 = scalar_lea.vmem [#allocation2], %s268
        %p270 = scmp.lt.s32.totalorder %s21, 1
        %s271 = scalar_select %p270, %s21, 1
        %s272 = smul.addr %s271, 8
        %s273 = scalar_lea.vmem %s0, %s272
        %v274 = vld [vmem:[%s273] sm:$0xff]
        %v275 = vld [vmem:[%s1] sm:$0xff]
        %v276 = vld [vmem:[%s1 + $0x8] sm:$0xff]
        %v277 = vld [vmem:[%s1 + $0x10] sm:$0xff]
        %v278 = vld [vmem:[%s1 + $0x18] sm:$0xff]
        %v279 = vld [vmem:[%s2] sm:$0x1]
        %v281 = vperm.slane %v279, 0
        %vm283 = vcmask 261120
        %v285 = vsel %vm283, %v274, 0
        %287 = vmatpush.msra.mxu0 0.0
        %288 = vmatpush.msra.mxu0 0.0
        %289 = vmatpush.msra.mxu0 0.0
        %290 = vmatpush.msra.mxu0 0.0
        %291 = vmatpush.msra.mxu0 0.0
        %292 = vmatpush.msra.mxu0 0.0
        %293 = vmatpush.msra.mxu0 0.0
        %294 = vmatpush.msra.mxu0 0.0
        %295 = vmatpush.msra.mxu0 0.0
        %296 = vmatpush.msra.mxu0 0.0
        %297 = vmatpush.msra.mxu0 0.0
        %298 = vmatpush.msra.mxu0 0.0
        %299 = vmatpush.msra.mxu0 %v278
        %300 = vmatpush.msra.mxu0 %v277
        %301 = vmatpush.msra.mxu0 %v276
        %302 = vmatpush.msra.mxu0 %v275
        %303 = vmatmul.f32.gmra.mxu0 %v285
        %v304 = vpop.f32.mrf.mxu0
        %v305 = vadd.f32 %v281, %v304
        %306 = vdwg.mxu0
        %v307 = vmul.f32 %v305, 0.5
        %v308 = vmul.f32 %v305, 0.70710677
        %v309 = vmul.f32 %v308, %v308
        %v310 = vmin.f32 16.0, %v309
        %v311 = vmul.f32 %v310, 2.1237322e-06
        %v312 = vadd.f32 %v311, 0.00028619796
        %v313 = vmul.f32 %v310, %v312
        %v314 = vadd.f32 %v313, 0.0036580483
        %v315 = vmul.f32 %v310, %v314
        %v316 = vadd.f32 %v315, 0.05243302
        %v317 = vmul.f32 %v310, %v316
        %v318 = vadd.f32 %v317, 0.18741608
        %v319 = vmul.f32 %v310, %v318
        %v320 = vadd.f32 %v319, 1.1283791
        %v321 = vmul.f32 %v308, %v320
        %v322 = vmul.f32 %v310, 3.8918573e-05
        %v323 = vadd.f32 %v322, 0.001143296
        %v324 = vmul.f32 %v310, %v323
        %v325 = vadd.f32 %v324, 0.014752088
        %v326 = vmul.f32 %v310, %v325
        %v327 = vadd.f32 %v326, 0.112945676
        %v328 = vmul.f32 %v310, %v327
        %v329 = vadd.f32 %v328, 0.4994258
        %v330 = vmul.f32 %v310, %v329
        %v331 = vadd.f32 %v330, 1.0
        %v332 = vrcp.pop %v331
        %v333 = vmul.f32 %v331, %v332
        %v334 = vsub.f32 1.0, %v333
        %v335 = vmul.f32 %v332, %v334
        %v336 = vadd.f32 %v332, %v335
        %vm337 = vweird.f32 %v331
        %vm338 = vweird.f32 %v332
        %vm339 = vmor %vm337, %vm338
        %v340 = vsel %vm339, %v332, %v336
        %v341 = vand.u32 2147483647, %v331
        %vm342 = vcmp.eq.f32.partialorder %v341, 8.507059e+37
        %v343 = vand.u32 %v331, 2147483648
        %v344 = vor.u32 1.1754944e-38, %v343
        %v345 = vsel %vm342, %v344, %v340
        %v346 = vmul.f32 %v321, %v345
        %v347 = vmin.f32 %v346, 1.0
        %v348 = vmax.f32 %v347, -1.0
        %v349 = vadd.f32 %v348, 1.0
        %v350 = vmul.f32 %v307, %v349
        %v351 = vsel %vm283, %v350, 0.0
        %352 = vadd.xlane.f32.xlu0 %v351
        %v353 = vpop.xlane.xlu0 %352
        %v354 = vrcp.pop 32.0
        %v355 = vmul.f32 32.0, %v354
        %v356 = vsub.f32 1.0, %v355
        %v357 = vmul.f32 %v354, %v356
        %v358 = vadd.f32 %v354, %v357
        %vm359 = vweird.f32 %v354
        %v360 = vsel %vm359, %v354, %v358
        %v361 = vmul.f32 %v353, %v360
        %v362 = vsub.f32 %v350, %v361
        %v363 = vmul.f32 %v362, %v362
        %v364 = vsel %vm283, %v363, 0.0
        %365 = vadd.xlane.f32.xlu0 %v364
        %v366 = vpop.xlane.xlu0 %365
        %v367 = vmul.f32 %v366, %v360
        %v368 = vadd.f32 %v367, 1e-05
        %v369 = vrsqrt.pop %v368
        %v370 = vmul.f32 %v369, %v368
        %v371 = vmul.f32 %v370, %v369
        %v372 = vmul.f32 0.5, %v371
        %v373 = vsub.f32 1.5, %v372
        %v374 = vmul.f32 %v369, %v373
        %vm375 = vweird.f32 %v368
        %vm376 = vweird.f32 %v369
        %vm377 = vmor %vm375, %vm376
        %v378 = vsel %vm377, %v369, %v374
        %v379 = vmul.f32 %v362, %v378
        %v380 = vld [vmem:[%s3] sm:$0x1]
        %v382 = vperm.slane %v380, 0
        %v384 = vmul.f32 %v379, %v382
        %v385 = vld [vmem:[%s4] sm:$0x1]
        %v387 = vperm.slane %v385, 0
        %v389 = vadd.f32 %v384, %v387
        %v390 = vld [vmem:[%s5] sm:$0xff]
        %v391 = vld [vmem:[%s5 + $0x8] sm:$0xff]
        %v392 = vld [vmem:[%s5 + $0x10] sm:$0xff]
        %v393 = vld [vmem:[%s5 + $0x18] sm:$0xff]
        %v394 = vld [vmem:[%s6] sm:$0x1]
        %v396 = vperm.slane %v394, 0
        %v399 = vsel %vm283, %v389, 0
        %401 = vmatpush.msra.mxu0 0.0
        %402 = vmatpush.msra.mxu0 0.0
        %403 = vmatpush.msra.mxu0 0.0
        %404 = vmatpush.msra.mxu0 0.0
        %405 = vmatpush.msra.mxu0 0.0
        %406 = vmatpush.msra.mxu0 0.0
        %407 = vmatpush.msra.mxu0 0.0
        %408 = vmatpush.msra.mxu0 0.0
        %409 = vmatpush.msra.mxu0 0.0
        %410 = vmatpush.msra.mxu0 0.0
        %411 = vmatpush.msra.mxu0 0.0
        %412 = vmatpush.msra.mxu0 0.0
        %413 = vmatpush.msra.mxu0 %v393
        %414 = vmatpush.msra.mxu0 %v392
        %415 = vmatpush.msra.mxu0 %v391
        %416 = vmatpush.msra.mxu0 %v390
        %417 = vmatmul.f32.gmra.mxu0 %v399
        %v418 = vpop.f32.mrf.mxu0
        %v419 = vadd.f32 %v396, %v418
        %420 = vdwg.mxu0
        %vm421 = vcmask 130048
        %422 = vst.msk [vmem:[%s269] sm:$0xff] %vm421, %v419
        %s423 = sand.u32 %s181, 1
        %s424 = scalar_lea.sflag [#allocation3], %s423
        %s425 = sand.u32 %s181, 1
        %s426 = smul.addr %s425, 8
        %s427 = scalar_lea.vmem [#allocation2], %s426
        // Predicated region
        $region49: #{tpu_custom_call.1} parent=47 // pred_check
          %p428 = pneg %p191
        $region50: #{tpu_custom_call.1} parent=47 // pred_check_branch
          %430 = sbr.rel (%p428) target = $region52
        $region51: #{tpu_custom_call.1} parent=47 // pred_region
          %432 = vsyncadd %s424, 0
          %s433 = smul.addr %s21, 8
          %s434 = scalar_lea.hbm %s7, %s433
          %s436 = sshll.u32 %s427, 4
          %s437 = int_to_ptr.vmem [resolvable:$true] %s436
          %s438 = sshll.u32 %s434, 4
          %s439 = int_to_ptr.hbm [resolvable:$true] %s438
          %441 = dma.vmem_to_hbm [thread:$0]  %s437, 128, %s439, %s424
        $region52: #{tpu_custom_call.1} parent=47 // pred_fallthru
          _
      $region48: #{tpu_custom_call.1} parent=5 // pred_fallthru
        _
      %p442 = scmp.le.s32.totalorder 2, %s16
      // Predicated region
      $region53: #{tpu_custom_call.1} parent=5 // pred_check
        %p443 = pneg %p442
      $region54: #{tpu_custom_call.1} parent=5 // pred_check_branch
        %445 = sbr.rel (%p443) target = $region56
      $region55: #{tpu_custom_call.1} parent=5 // pred_region
        %s446 = ssub.s32 %s16, 2
        // Predicated region
        $region57: #{tpu_custom_call.1} parent=55 // pred_check
          %p447 = pneg %p197
        $region58: #{tpu_custom_call.1} parent=55 // pred_check_branch
          %449 = sbr.rel (%p447) target = $region60
        $region59: #{tpu_custom_call.1} parent=55 // pred_region
          %s450 = sand.u32 %s182, 1
          %s451 = scalar_lea.sflag [#allocation3], %s450
          %s452 = sand.u32 %s182, 1
          %s453 = smul.addr %s452, 8
          %s454 = scalar_lea.vmem [#allocation2], %s453
          %456 = dma.done %s451, 128
        $region60: #{tpu_custom_call.1} parent=55 // pred_fallthru
          _
      $region56: #{tpu_custom_call.1} parent=5 // pred_fallthru
        _
    $region6: #{tpu_custom_call.1} parent=1 // loop_footer
      %s20 = sadd.s32 1, %s16
    $region7: #{tpu_custom_call.1} parent=1 // loop_footer_branch
      %15 = sbr.rel target = $region3
    $region8: #{tpu_custom_call.1} parent=1 // loop_exit
      _
    %457 = vsyncpa [#allocation3], 1
    %s458 = scalar_lea.sflag [#allocation3], 1
    %459 = vsyncpa %s458, 1

</llo_original>
